<compile_context>
chip_gen: v5e
topology: v5e:2x2
jax: 0.10.0
libtpu: 0.0.40
codegen_flags: <defaults>
</compile_context>

<pallas_src>
import math

import jax
import jax.numpy as jnp
from jax.experimental import pallas as pl
from jax.experimental.pallas import tpu as pltpu


# ----------------------------------------------------------------------------
# Kernel 1: K / V projection (runs once over all points, O(N) work)
# ----------------------------------------------------------------------------
def _kv_proj_kernel(img_ref, emb_ref, wk_img_ref, wk_emb_ref,
                    wv_img_ref, wv_emb_ref, k_ref, v_ref):
    img = img_ref[...]
    emb = emb_ref[...]
    k = jnp.dot(img, wk_img_ref[...], preferred_element_type=jnp.float32)
    k = k + jnp.dot(emb, wk_emb_ref[...], preferred_element_type=jnp.float32)
    v = jnp.dot(img, wv_img_ref[...], preferred_element_type=jnp.float32)
    v = v + jnp.dot(emb, wv_emb_ref[...], preferred_element_type=jnp.float32)
    k_ref[...] = k.astype(k_ref.dtype)
    v_ref[...] = v.astype(v_ref.dtype)


# ----------------------------------------------------------------------------
# Kernel 2: fused flash attention + NeRF decoder MLP
# ----------------------------------------------------------------------------
def _make_fused_kernel(tile_kv):
    """Returns the fused attention + decoder kernel body."""

    def kernel(emb_q_ref, img_q_ref, k_ref, v_ref, mask_ref,
               wq_img_ref, wq_emb_ref, wo_ref,
               w1_emb_ref, w1_attn_ref, b1_ref, w2_ref, b2_ref,
               w3_ref, b3_ref,
               o_ref,
               q_sc, m_sc, l_sc, acc_sc):
        j = pl.program_id(1)
        n_kv = pl.num_programs(1)

        # --- first key block: project Q for this query tile, init accumulators
        @pl.when(j == 0)
        def _init():
            q = jnp.dot(img_q_ref[...], wq_img_ref[...],
                        preferred_element_type=jnp.float32)
            q = q + jnp.dot(emb_q_ref[...], wq_emb_ref[...],
                            preferred_element_type=jnp.float32)
            q_sc[...] = q.astype(q_sc.dtype)        # softmax scale folded in Wq
            m_sc[...] = jnp.full(m_sc.shape, -jnp.inf, m_sc.dtype)
            l_sc[...] = jnp.zeros(l_sc.shape, l_sc.dtype)
            acc_sc[...] = jnp.zeros(acc_sc.shape, acc_sc.dtype)

        # --- current key block from the VMEM-resident K/V slabs
        off = pl.multiple_of(j * tile_kv, tile_kv)
        k = k_ref[pl.ds(off, tile_kv), :]
        v = v_ref[pl.ds(off, tile_kv), :]

        # --- scores: contract head dims directly (no k.T materialized)
        s = jax.lax.dot_general(q_sc[...], k, (((1,), (1,)), ((), ())),
                                preferred_element_type=jnp.float32)
        # additive padding mask (0 valid / -1e30 padded); finite so that fully
        # padded blocks cannot produce inf-inf -> NaN in (s - m_new)
        s = s + mask_ref[...]

        # --- online softmax update (f32).  NOTE: a bf16 exp path would be a
        # further v6e/v7x-only EUP win but is skipped to keep accuracy margin.
        m_prev = m_sc[...]
        m_new = jnp.maximum(m_prev, s.max(axis=-1, keepdims=True))
        alpha = jnp.exp(m_prev - m_new)
        p = jnp.exp(s - m_new)
        l_sc[...] = alpha * l_sc[...] + p.sum(axis=-1, keepdims=True)
        acc_sc[...] = alpha * acc_sc[...] + jnp.dot(
            p.astype(jnp.bfloat16), v, preferred_element_type=jnp.float32)
        m_sc[...] = m_new

        # --- last key block: attention output proj + NeRF decoder MLP
        @pl.when(j == n_kv - 1)
        def _finalize():
            attn = acc_sc[...] * pl.reciprocal(l_sc[...], approx=True)
            attn_out = jnp.dot(attn.astype(jnp.bfloat16), wo_ref[...],
                               preferred_element_type=jnp.float32)
            # decoder_input @ W1 = emb @ W1_emb + attn_out @ W1_attn
            h = jnp.dot(emb_q_ref[...], w1_emb_ref[...],
                        preferred_element_type=jnp.float32)
            h = h + jnp.dot(attn_out.astype(jnp.bfloat16), w1_attn_ref[...],
                            preferred_element_type=jnp.float32)
            h = jnp.maximum(h + b1_ref[...], 0.0)
            h = jnp.dot(h.astype(jnp.bfloat16), w2_ref[...],
                        preferred_element_type=jnp.float32)
            h = jnp.maximum(h + b2_ref[...], 0.0)
            out = jnp.dot(h.astype(jnp.bfloat16), w3_ref[...],
                          preferred_element_type=jnp.float32)
            o_ref[...] = (out + b3_ref[...]).astype(o_ref.dtype)

    return kernel


# ----------------------------------------------------------------------------
# Wrapper
# ----------------------------------------------------------------------------
def nerf_attention_forward(inputs, params, attention_embed_ln,
                           *, tile_q=256, tile_kv=512):
    """Mirrors NeRFAttentionModel.forward semantics (fused, tiled)."""
    emb_f32, img_f32 = inputs                     # (N,E), (N,F)
    n, e_dim = emb_f32.shape
    f_img = img_f32.shape[-1]
    d_head = params["wq"].shape[-1]
    d_attn_out = params["wo"].shape[-1]
    h_dim = params["w1"].shape[-1]
    d_out = params["w3"].shape[-1]
    d_out_pad = pl.cdiv(d_out, 128) * 128         # lane-dense output slab

    # --- pad the point axis to a multiple of both tiles
    n_step = math.lcm(tile_q, tile_kv)
    n_pad = pl.cdiv(n, n_step) * n_step
    pad = n_pad - n
    if pad:
        emb_f32 = jnp.pad(emb_f32, ((0, pad), (0, 0)))
        img_f32 = jnp.pad(img_f32, ((0, pad), (0, 0)))

    bf = lambda a: a.astype(jnp.bfloat16)
    emb_bf, img_bf = bf(emb_f32), bf(img_f32)

    # --- fold concat([img, emb[:, :attn_embed_ln]]) / column-slice into split,
    #     zero-padded weights; fold softmax scale into Wq.
    scale = 1.0 / (d_head ** 0.5)
    wq, wk, wv = params["wq"], params["wk"], params["wv"]
    wq_img = wq[:f_img] * scale
    wq_emb = jnp.zeros((e_dim, d_head), jnp.float32).at[
        :attention_embed_ln].set(wq[f_img:] * scale)
    wk_img = wk[:f_img]
    wk_emb = jnp.zeros((e_dim, d_head), jnp.float32).at[
        :attention_embed_ln].set(wk[f_img:])
    wv_img = wv[:f_img]
    wv_emb = jnp.zeros((e_dim, d_head), jnp.float32).at[
        :attention_embed_ln].set(wv[f_img:])

    w1 = params["w1"]
    w1_emb, w1_attn = w1[:e_dim], w1[e_dim:]
    w3_pad = jnp.zeros((h_dim, d_out_pad), jnp.float32).at[:, :d_out].set(
        params["w3"])
    b3_pad = jnp.zeros((1, d_out_pad), jnp.float32).at[:, :d_out].set(
        params["b3"])

    # additive key mask: 0 for valid rows, -1e30 (finite!) for padded rows
    mask = jnp.where(jnp.arange(n_pad)[None, :] < n, 0.0, -1e30
                     ).astype(jnp.float32)

    # ------------------------------------------------------------------
    # Pass 1: K / V projection, computed once (no per-query-tile recompute)
    # ------------------------------------------------------------------
    fixed1 = lambda i: (0, 0)
    k_all, v_all = pl.pallas_call(
        _kv_proj_kernel,
        out_shape=(jax.ShapeDtypeStruct((n_pad, d_head), jnp.bfloat16),
                   jax.ShapeDtypeStruct((n_pad, d_head), jnp.bfloat16)),
        grid_spec=pltpu.PrefetchScalarGridSpec(
            num_scalar_prefetch=0,
            grid=(n_pad // tile_kv,),
            in_specs=[pl.BlockSpec((tile_kv, f_img), lambda i: (i, 0)),
                      pl.BlockSpec((tile_kv, e_dim), lambda i: (i, 0)),
                      pl.BlockSpec((f_img, d_head), fixed1),
                      pl.BlockSpec((e_dim, d_head), fixed1),
                      pl.BlockSpec((f_img, d_head), fixed1),
                      pl.BlockSpec((e_dim, d_head), fixed1)],
            out_specs=(pl.BlockSpec((tile_kv, d_head), lambda i: (i, 0)),
                       pl.BlockSpec((tile_kv, d_head), lambda i: (i, 0)))),
        compiler_params=pltpu.CompilerParams(
            dimension_semantics=("parallel",)),
    )(img_bf, emb_bf, bf(wk_img), bf(wk_emb), bf(wv_img), bf(wv_emb))

    # ------------------------------------------------------------------
    # Pass 2: fused flash attention + decoder MLP
    # ------------------------------------------------------------------
    grid = (n_pad // tile_q, n_pad // tile_kv)
    kernel = _make_fused_kernel(tile_kv)

    rows_q = lambda i, j: (i, 0)
    fixed = lambda i, j: (0, 0)     # resident across the whole grid

    in_specs = [
        pl.BlockSpec((tile_q, e_dim), rows_q),         # embeded_features (q)
        pl.BlockSpec((tile_q, f_img), rows_q),         # image_features   (q)
        pl.BlockSpec((n_pad, d_head), fixed),          # K (VMEM-resident slab)
        pl.BlockSpec((n_pad, d_head), fixed),          # V (VMEM-resident slab)
        pl.BlockSpec((1, tile_kv), lambda i, j: (0, j)),  # additive mask
        pl.BlockSpec((f_img, d_head), fixed),          # wq_img (scaled)
        pl.BlockSpec((e_dim, d_head), fixed),          # wq_emb (scaled, padded)
        pl.BlockSpec((d_head, d_attn_out), fixed),     # wo
        pl.BlockSpec((e_dim, h_dim), fixed),           # w1 top rows
        pl.BlockSpec((d_attn_out, h_dim), fixed),      # w1 bottom rows
        pl.BlockSpec((1, h_dim), fixed),               # b1
        pl.BlockSpec((h_dim, h_dim), fixed),           # w2
        pl.BlockSpec((1, h_dim), fixed),               # b2
        pl.BlockSpec((h_dim, d_out_pad), fixed),       # w3 (lane-padded)
        pl.BlockSpec((1, d_out_pad), fixed),           # b3 (lane-padded)
    ]
    out_spec = pl.BlockSpec((tile_q, d_out_pad), rows_q)
    scratch = [
        pltpu.VMEM((tile_q, d_head), jnp.bfloat16),    # q (scaled)
        pltpu.VMEM((tile_q, 1), jnp.float32),          # running max
        pltpu.VMEM((tile_q, 1), jnp.float32),          # running sum
        pltpu.VMEM((tile_q, d_head), jnp.float32),     # output accumulator
    ]

    # advisory cost estimate (KV recompute removed -> no n_q_tiles factors)
    n_q_tiles = grid[0]
    flops = int(
        2 * n_pad * (f_img + e_dim) * d_head                   # Q projection
        + 4 * n_pad * n_pad * d_head                           # scores + P.V
        + 2 * n_pad * (d_head * d_attn_out + e_dim * h_dim
                       + d_attn_out * h_dim + h_dim * h_dim
                       + h_dim * d_out_pad))                   # out proj + MLP
    bytes_accessed = int(
        (emb_bf.size + img_bf.size) * 2                        # streamed once
        + 2 * (k_all.size + v_all.size)                        # K/V read once
        + n_pad * d_out_pad * 4                                # output
        + 4 * n_pad * n_q_tiles                                # mask re-reads
        + 2 * (wq_img.size + wq_emb.size + params["wo"].size
               + w1_emb.size + w1_attn.size + params["w2"].size + w3_pad.size)
        + 4 * (params["b1"].size + params["b2"].size + b3_pad.size))
    cost = pl.CostEstimate(flops=flops, transcendentals=int(n_pad * n_pad),
                           bytes_accessed=bytes_accessed)

    out_padded = pl.pallas_call(
        kernel,
        out_shape=jax.ShapeDtypeStruct((n_pad, d_out_pad), jnp.float32),
        grid_spec=pltpu.PrefetchScalarGridSpec(
            num_scalar_prefetch=0,
            grid=grid,
            in_specs=in_specs,
            out_specs=out_spec,
            scratch_shapes=scratch),
        compiler_params=pltpu.CompilerParams(
            dimension_semantics=("parallel", "arbitrary"),
            # Actual use is a few MB even at production N; 32 MiB is well
            # inside every generation's budget (v7x: 64 MiB physical).
            vmem_limit_bytes=32 * 1024 * 1024),
        cost_estimate=cost,
    )(emb_bf, img_bf, k_all, v_all, mask,
      bf(wq_img), bf(wq_emb), bf(params["wo"]),
      bf(w1_emb), bf(w1_attn), params["b1"],
      bf(params["w2"]), params["b2"],
      bf(w3_pad), b3_pad)

    return out_padded[:n, :d_out]


# ----------------------------------------------------------------------------
# Pure-JAX f32 reference (module semantics) for a sanity check
# ----------------------------------------------------------------------------
def reference_forward(inputs, params, attention_embed_ln):
    emb_f, img_f = inputs
    pts = emb_f[..., :attention_embed_ln]
    x = jnp.concatenate([img_f, pts], axis=-1)
    q = x @ params["wq"]
    k = x @ params["wk"]
    v = x @ params["wv"]
    s = (q @ k.T) / jnp.sqrt(jnp.float32(params["wq"].shape[-1]))
    attn_out = (jax.nn.softmax(s, axis=-1) @ v) @ params["wo"]
    dec = jnp.concatenate([emb_f, attn_out], axis=-1)
    h = jax.nn.relu(dec @ params["w1"] + params["b1"])
    h = jax.nn.relu(h @ params["w2"] + params["b2"])
    return h @ params["w3"] + params["b3"]


# ----------------------------------------------------------------------------
# Main
# ----------------------------------------------------------------------------
if __name__ == "__main__":
    # Small shapes consistent with the module (production: n_pts=2048*3, f=196).
    N = 600                 # n_pts (not a tile multiple -> exercises masking)
    E = 64                  # embedding_len
    ATTN_EMBED_LN = 32      # attention_embed_ln
    F_IMG = 32              # cnn feature dim
    D_ATTN_IN = F_IMG + ATTN_EMBED_LN
    D_HEAD = 32
    D_ATTN_OUT = 32
    D_DEC_IN = E + D_ATTN_OUT
    H = 64
    D_OUT = 4               # RGB + sigma

    key = jax.random.PRNGKey(0)
    keys = jax.random.split(key, 12)

    embeded_features = jax.random.normal(keys[0], (N, E), jnp.float32)
    image_features = jax.random.normal(keys[1], (N, F_IMG), jnp.float32)

    def winit(k, shape, fan_in):
        return jax.random.normal(k, shape, jnp.float32) * (1.0 / (fan_in ** 0.5))

    params = {
        # attention_model (single-head self-attention) weights
        "wq": winit(keys[2], (D_ATTN_IN, D_HEAD), D_ATTN_IN),
        "wk": winit(keys[3], (D_ATTN_IN, D_HEAD), D_ATTN_IN),
        "wv": winit(keys[4], (D_ATTN_IN, D_HEAD), D_ATTN_IN),
        "wo": winit(keys[5], (D_HEAD, D_ATTN_OUT), D_HEAD),
        # nerf_model (decoder MLP) weights
        "w1": winit(keys[6], (D_DEC_IN, H), D_DEC_IN),
        "b1": jnp.zeros((1, H), jnp.float32),
        "w2": winit(keys[7], (H, H), H),
        "b2": jnp.zeros((1, H), jnp.float32),
        "w3": winit(keys[8], (H, D_OUT), H),
        "b3": jnp.zeros((1, D_OUT), jnp.float32),
    }

    # Small tiles for the test so multiple q-tiles and multiple kv steps
    # (including dynamic K/V offsets and the padding mask) are exercised.
    out = nerf_attention_forward(
        (embeded_features, image_features), params, ATTN_EMBED_LN,
        tile_q=256, tile_kv=256)
    out = jax.block_until_ready(out)

    assert out.shape == (N, D_OUT), out.shape
    assert bool(jnp.all(jnp.isfinite(out)))

    ref = reference_forward((embeded_features, image_features), params,
                            ATTN_EMBED_LN)
    rel_err = jnp.linalg.norm(out - ref) / (jnp.linalg.norm(ref) + 1e-8)
    assert float(rel_err) < 5e-2, f"relative error too large: {float(rel_err)}"

    print("KERNEL_OK")
</pallas_src>

<mosaic_0001>
module attributes {stable_mosaic.version = 11 : i64} {
  func.func @_kv_proj_kernel(%arg0: i32, %arg1: memref<256x32xbf16, #tpu.memory_space<vmem>>, %arg2: memref<256x64xbf16, #tpu.memory_space<vmem>>, %arg3: memref<32x32xbf16, #tpu.memory_space<vmem>>, %arg4: memref<64x32xbf16, #tpu.memory_space<vmem>>, %arg5: memref<32x32xbf16, #tpu.memory_space<vmem>>, %arg6: memref<64x32xbf16, #tpu.memory_space<vmem>>, %arg7: memref<256x32xbf16, #tpu.memory_space<vmem>>, %arg8: memref<256x32xbf16, #tpu.memory_space<vmem>>) attributes {dimension_semantics = [#tpu.dimension_semantics<parallel>], iteration_bounds = array<i64: 3>, scalar_prefetch = 0 : i64, scratch_operands = 0 : i64, tpu.core_type = #tpu.core_type<tc>, window_params = [{transform_indices = @transform_0, window_bounds = array<i64: 256, 32>}, {transform_indices = @transform_1, window_bounds = array<i64: 256, 64>}, {pipeline_mode = #tpu.pipeline_mode<synchronous>, transform_indices = @transform_2, window_bounds = array<i64: 32, 32>}, {pipeline_mode = #tpu.pipeline_mode<synchronous>, transform_indices = @transform_3, window_bounds = array<i64: 64, 32>}, {pipeline_mode = #tpu.pipeline_mode<synchronous>, transform_indices = @transform_4, window_bounds = array<i64: 32, 32>}, {pipeline_mode = #tpu.pipeline_mode<synchronous>, transform_indices = @transform_5, window_bounds = array<i64: 64, 32>}, {transform_indices = @transform_6, window_bounds = array<i64: 256, 32>}, {transform_indices = @transform_7, window_bounds = array<i64: 256, 32>}]} {
    %c0 = arith.constant 0 : index
    %c0_0 = arith.constant 0 : index
    %0 = vector.load %arg1[%c0, %c0_0] : memref<256x32xbf16, #tpu.memory_space<vmem>>, vector<256x32xbf16>
    %c0_1 = arith.constant 0 : index
    %c0_2 = arith.constant 0 : index
    %1 = vector.load %arg2[%c0_1, %c0_2] : memref<256x64xbf16, #tpu.memory_space<vmem>>, vector<256x64xbf16>
    %c0_3 = arith.constant 0 : index
    %c0_4 = arith.constant 0 : index
    %2 = vector.load %arg3[%c0_3, %c0_4] : memref<32x32xbf16, #tpu.memory_space<vmem>>, vector<32x32xbf16>
    %cst = arith.constant dense<0.000000e+00> : vector<256x32xf32>
    %3 = tpu.matmul %0, %2, %cst {dimension_numbers = #tpu.dot_dimension_numbers<[1], [0], [0], [1], [0, 0, 1, 1], [], []>} : vector<256x32xbf16>, vector<32x32xbf16>, vector<256x32xf32> -> vector<256x32xf32>
    %c0_5 = arith.constant 0 : index
    %c0_6 = arith.constant 0 : index
    %4 = vector.load %arg4[%c0_5, %c0_6] : memref<64x32xbf16, #tpu.memory_space<vmem>>, vector<64x32xbf16>
    %cst_7 = arith.constant dense<0.000000e+00> : vector<256x32xf32>
    %5 = tpu.matmul %1, %4, %cst_7 {dimension_numbers = #tpu.dot_dimension_numbers<[1], [0], [0], [1], [0, 0, 1, 1], [], []>} : vector<256x64xbf16>, vector<64x32xbf16>, vector<256x32xf32> -> vector<256x32xf32>
    %6 = arith.addf %3, %5 : vector<256x32xf32>
    %c0_8 = arith.constant 0 : index
    %c0_9 = arith.constant 0 : index
    %7 = vector.load %arg5[%c0_8, %c0_9] : memref<32x32xbf16, #tpu.memory_space<vmem>>, vector<32x32xbf16>
    %cst_10 = arith.constant dense<0.000000e+00> : vector<256x32xf32>
    %8 = tpu.matmul %0, %7, %cst_10 {dimension_numbers = #tpu.dot_dimension_numbers<[1], [0], [0], [1], [0, 0, 1, 1], [], []>} : vector<256x32xbf16>, vector<32x32xbf16>, vector<256x32xf32> -> vector<256x32xf32>
    %c0_11 = arith.constant 0 : index
    %c0_12 = arith.constant 0 : index
    %9 = vector.load %arg6[%c0_11, %c0_12] : memref<64x32xbf16, #tpu.memory_space<vmem>>, vector<64x32xbf16>
    %cst_13 = arith.constant dense<0.000000e+00> : vector<256x32xf32>
    %10 = tpu.matmul %1, %9, %cst_13 {dimension_numbers = #tpu.dot_dimension_numbers<[1], [0], [0], [1], [0, 0, 1, 1], [], []>} : vector<256x64xbf16>, vector<64x32xbf16>, vector<256x32xf32> -> vector<256x32xf32>
    %11 = arith.addf %8, %10 : vector<256x32xf32>
    %12 = arith.truncf %6 : vector<256x32xf32> to vector<256x32xbf16>
    %c0_14 = arith.constant 0 : index
    %c0_15 = arith.constant 0 : index
    %13 = vector.load %arg7[%c0_14, %c0_15] : memref<256x32xbf16, #tpu.memory_space<vmem>>, vector<256x32xbf16>
    tpu.vector_store %arg7[%c0_14, %c0_15], %12 {strides = array<i32>} : memref<256x32xbf16, #tpu.memory_space<vmem>>, vector<256x32xbf16>,
    %14 = arith.truncf %11 : vector<256x32xf32> to vector<256x32xbf16>
    %c0_16 = arith.constant 0 : index
    %c0_17 = arith.constant 0 : index
    %15 = vector.load %arg8[%c0_16, %c0_17] : memref<256x32xbf16, #tpu.memory_space<vmem>>, vector<256x32xbf16>
    tpu.vector_store %arg8[%c0_16, %c0_17], %14 {strides = array<i32>} : memref<256x32xbf16, #tpu.memory_space<vmem>>, vector<256x32xbf16>,
    return
  }
  func.func @transform_0(%arg0: i32) -> (i32, i32) {
    %c0_i32 = arith.constant 0 : i32
    %c0_i32_0 = arith.constant 0 : i32
    return %arg0, %c0_i32 : i32, i32
  }
  func.func @transform_1(%arg0: i32) -> (i32, i32) {
    %c0_i32 = arith.constant 0 : i32
    %c0_i32_0 = arith.constant 0 : i32
    return %arg0, %c0_i32 : i32, i32
  }
  func.func @transform_2(%arg0: i32) -> (i32, i32) {
    %c0_i32 = arith.constant 0 : i32
    %c0_i32_0 = arith.constant 0 : i32
    %c0_i32_1 = arith.constant 0 : i32
    return %c0_i32, %c0_i32_0 : i32, i32
  }
  func.func @transform_3(%arg0: i32) -> (i32, i32) {
    %c0_i32 = arith.constant 0 : i32
    %c0_i32_0 = arith.constant 0 : i32
    %c0_i32_1 = arith.constant 0 : i32
    return %c0_i32, %c0_i32_0 : i32, i32
  }
  func.func @transform_4(%arg0: i32) -> (i32, i32) {
    %c0_i32 = arith.constant 0 : i32
    %c0_i32_0 = arith.constant 0 : i32
    %c0_i32_1 = arith.constant 0 : i32
    return %c0_i32, %c0_i32_0 : i32, i32
  }
  func.func @transform_5(%arg0: i32) -> (i32, i32) {
    %c0_i32 = arith.constant 0 : i32
    %c0_i32_0 = arith.constant 0 : i32
    %c0_i32_1 = arith.constant 0 : i32
    return %c0_i32, %c0_i32_0 : i32, i32
  }
  func.func @transform_6(%arg0: i32) -> (i32, i32) {
    %c0_i32 = arith.constant 0 : i32
    %c0_i32_0 = arith.constant 0 : i32
    return %arg0, %c0_i32 : i32, i32
  }
  func.func @transform_7(%arg0: i32) -> (i32, i32) {
    %c0_i32 = arith.constant 0 : i32
    %c0_i32_0 = arith.constant 0 : i32
    return %arg0, %c0_i32 : i32, i32
  }
}

</mosaic_0001>

<llo_original>
// kernel: tpu_custom_call.1
$region0: #{tpu_custom_call.1}
  #allocation0 [shape = 'u32[]', space=smem, size = 0x4, offset = 0x4, fixed_abs, tag = 'smem constant byte address 0x4 - core index']
  #allocation1 [shape = 'u32[72,128]{1,0:T(1,128)}', space=vmem, size = 0x9000, scoped, tag = 'internal scratch']
  %s0 = inlined_call_operand.vmem [shape: bf16[768,32], index: 0, kind: input, shape index: {}]
  %s1 = inlined_call_operand.vmem [shape: bf16[768,64], index: 1, kind: input, shape index: {}]
  %s2 = inlined_call_operand.vmem [shape: bf16[32,32], index: 2, kind: input, shape index: {}]
  %s3 = inlined_call_operand.vmem [shape: bf16[64,32], index: 3, kind: input, shape index: {}]
  %s4 = inlined_call_operand.vmem [shape: bf16[32,32], index: 4, kind: input, shape index: {}]
  %s5 = inlined_call_operand.vmem [shape: bf16[64,32], index: 5, kind: input, shape index: {}]
  %s6 = inlined_call_operand.vmem [shape: bf16[768,32], index: 6, kind: output, shape index: {0}]
  %s7 = inlined_call_operand.vmem [shape: bf16[768,32], index: 7, kind: output, shape index: {1}]
  %8 = xla_tuple %s6, %s7
  %s9 = sld [smem:[#allocation0]]
  $region65: #{tpu_custom_call.1} parent=0
    _
  %s11 = ssub.s32 1, %s9
  %s12 = scalar_select 0, %s11, %s9
  loop: start=0, step=1, limit=5
  $region2: #{tpu_custom_call.1} parent=0 // loop_pre_header
    _
  $region3: #{tpu_custom_call.1} parent=0 // loop_header
    %s14 = sphi 0, %s18
    %p15 = scmp.ge.s32.totalorder %s14, 5
    %s24 = sphi 0, %s26
    %s27 = sphi 0, %s24
    %s28 = sphi 0, %s27
    %s44 = sphi 0, %s28
    %s50 = sphi 0, %s52
    %s53 = sphi 0, %s50
    %s54 = sphi 0, %s53
    %s70 = sphi 0, %s54
    %s74 = sphi 0, %s74
    %s76 = sphi 0, %s74
    %s77 = sphi 0, %s76
    %s91 = sphi 0, %s77
    %s95 = sphi 0, %s95
    %s97 = sphi 0, %s95
    %s98 = sphi 0, %s97
    %s112 = sphi 0, %s98
    %s116 = sphi 0, %s116
    %s118 = sphi 0, %s116
    %s119 = sphi 0, %s118
    %s133 = sphi 0, %s119
    %s137 = sphi 0, %s137
    %s139 = sphi 0, %s137
    %s140 = sphi 0, %s139
    %s154 = sphi 0, %s140
    %s160 = sphi 0, %s162
    %s163 = sphi 0, %s160
    %s164 = sphi 0, %s163
    %s180 = sphi 0, %s164
    %s186 = sphi 0, %s188
    %s189 = sphi 0, %s186
    %s190 = sphi 0, %s189
    %s206 = sphi 0, %s190
  $region4: #{tpu_custom_call.1} parent=0 // loop_header_branch
    %17 = sbr.rel (%p15) target = $region8
  $region5: #{tpu_custom_call.1} parent=0 // loop_body
    %s19 = ssub.s32 %s14, 1
    %s20 = ssub.s32 %s14, 2
    %s21 = sadd.s32 %s14, 1
    %s22 = ssub.s32 %s14, %s21
    %p23 = scmp.eq.s32.totalorder %s22, 0
    %s25 = sadd.s32 %s24, 1
    %s26 = scalar_select %p23, %s24, %s25
    %p29 = pneg %p23
    %p30 = scmp.eq.s32.totalorder %s14, 2
    %p31 = por %p29, %p30
    %p32 = scmp.ne.s32.totalorder %s24, %s27
    %p33 = scmp.eq.s32.totalorder %s14, 0
    %p34 = por %p32, %p33
    %p35 = scmp.ne.s32.totalorder %s24, %s27
    %p36 = scmp.eq.s32.totalorder %s19, 2
    %p37 = por %p35, %p36
    %p38 = scmp.ne.s32.totalorder %s27, %s28
    %p39 = scmp.eq.s32.totalorder %s19, 0
    %p40 = por %p38, %p39
    %p41 = scmp.ne.s32.totalorder %s27, %s28
    %p42 = scmp.eq.s32.totalorder %s20, 2
    %p43 = por %p41, %p42
    %p45 = scmp.ne.s32.totalorder %s28, %s44
    %p46 = scmp.eq.s32.totalorder %s20, 0
    %p47 = por %p45, %p46
    %s48 = ssub.s32 %s14, %s21
    %p49 = scmp.eq.s32.totalorder %s48, 0
    %s51 = sadd.s32 %s50, 1
    %s52 = scalar_select %p49, %s50, %s51
    %p55 = pneg %p49
    %p56 = scmp.eq.s32.totalorder %s14, 2
    %p57 = por %p55, %p56
    %p58 = scmp.ne.s32.totalorder %s50, %s53
    %p59 = scmp.eq.s32.totalorder %s14, 0
    %p60 = por %p58, %p59
    %p61 = scmp.ne.s32.totalorder %s50, %s53
    %p62 = scmp.eq.s32.totalorder %s19, 2
    %p63 = por %p61, %p62
    %p64 = scmp.ne.s32.totalorder %s53, %s54
    %p65 = scmp.eq.s32.totalorder %s19, 0
    %p66 = por %p64, %p65
    %p67 = scmp.ne.s32.totalorder %s53, %s54
    %p68 = scmp.eq.s32.totalorder %s20, 2
    %p69 = por %p67, %p68
    %p71 = scmp.ne.s32.totalorder %s54, %s70
    %p72 = scmp.eq.s32.totalorder %s20, 0
    %p73 = por %p71, %p72
    %s75 = sadd.s32 %s74, 1
    %p78 = scmp.eq.s32.totalorder %s14, 2
    %p79 = scmp.ne.s32.totalorder %s74, %s76
    %p80 = scmp.eq.s32.totalorder %s14, 0
    %p81 = por %p79, %p80
    %p82 = scmp.ne.s32.totalorder %s74, %s76
    %p83 = scmp.eq.s32.totalorder %s19, 2
    %p84 = por %p82, %p83
    %p85 = scmp.ne.s32.totalorder %s76, %s77
    %p86 = scmp.eq.s32.totalorder %s19, 0
    %p87 = por %p85, %p86
    %p88 = scmp.ne.s32.totalorder %s76, %s77
    %p89 = scmp.eq.s32.totalorder %s20, 2
    %p90 = por %p88, %p89
    %p92 = scmp.ne.s32.totalorder %s77, %s91
    %p93 = scmp.eq.s32.totalorder %s20, 0
    %p94 = por %p92, %p93
    %s96 = sadd.s32 %s95, 1
    %p99 = scmp.eq.s32.totalorder %s14, 2
    %p100 = scmp.ne.s32.totalorder %s95, %s97
    %p101 = scmp.eq.s32.totalorder %s14, 0
    %p102 = por %p100, %p101
    %p103 = scmp.ne.s32.totalorder %s95, %s97
    %p104 = scmp.eq.s32.totalorder %s19, 2
    %p105 = por %p103, %p104
    %p106 = scmp.ne.s32.totalorder %s97, %s98
    %p107 = scmp.eq.s32.totalorder %s19, 0
    %p108 = por %p106, %p107
    %p109 = scmp.ne.s32.totalorder %s97, %s98
    %p110 = scmp.eq.s32.totalorder %s20, 2
    %p111 = por %p109, %p110
    %p113 = scmp.ne.s32.totalorder %s98, %s112
    %p114 = scmp.eq.s32.totalorder %s20, 0
    %p115 = por %p113, %p114
    %s117 = sadd.s32 %s116, 1
    %p120 = scmp.eq.s32.totalorder %s14, 2
    %p121 = scmp.ne.s32.totalorder %s116, %s118
    %p122 = scmp.eq.s32.totalorder %s14, 0
    %p123 = por %p121, %p122
    %p124 = scmp.ne.s32.totalorder %s116, %s118
    %p125 = scmp.eq.s32.totalorder %s19, 2
    %p126 = por %p124, %p125
    %p127 = scmp.ne.s32.totalorder %s118, %s119
    %p128 = scmp.eq.s32.totalorder %s19, 0
    %p129 = por %p127, %p128
    %p130 = scmp.ne.s32.totalorder %s118, %s119
    %p131 = scmp.eq.s32.totalorder %s20, 2
    %p132 = por %p130, %p131
    %p134 = scmp.ne.s32.totalorder %s119, %s133
    %p135 = scmp.eq.s32.totalorder %s20, 0
    %p136 = por %p134, %p135
    %s138 = sadd.s32 %s137, 1
    %p141 = scmp.eq.s32.totalorder %s14, 2
    %p142 = scmp.ne.s32.totalorder %s137, %s139
    %p143 = scmp.eq.s32.totalorder %s14, 0
    %p144 = por %p142, %p143
    %p145 = scmp.ne.s32.totalorder %s137, %s139
    %p146 = scmp.eq.s32.totalorder %s19, 2
    %p147 = por %p145, %p146
    %p148 = scmp.ne.s32.totalorder %s139, %s140
    %p149 = scmp.eq.s32.totalorder %s19, 0
    %p150 = por %p148, %p149
    %p151 = scmp.ne.s32.totalorder %s139, %s140
    %p152 = scmp.eq.s32.totalorder %s20, 2
    %p153 = por %p151, %p152
    %p155 = scmp.ne.s32.totalorder %s140, %s154
    %p156 = scmp.eq.s32.totalorder %s20, 0
    %p157 = por %p155, %p156
    %s158 = ssub.s32 %s14, %s21
    %p159 = scmp.eq.s32.totalorder %s158, 0
    %s161 = sadd.s32 %s160, 1
    %s162 = scalar_select %p159, %s160, %s161
    %p165 = pneg %p159
    %p166 = scmp.eq.s32.totalorder %s14, 2
    %p167 = por %p165, %p166
    %p168 = scmp.ne.s32.totalorder %s160, %s163
    %p169 = scmp.eq.s32.totalorder %s14, 0
    %p170 = por %p168, %p169
    %p171 = scmp.ne.s32.totalorder %s160, %s163
    %p172 = scmp.eq.s32.totalorder %s19, 2
    %p173 = por %p171, %p172
    %p174 = scmp.ne.s32.totalorder %s163, %s164
    %p175 = scmp.eq.s32.totalorder %s19, 0
    %p176 = por %p174, %p175
    %p177 = scmp.ne.s32.totalorder %s163, %s164
    %p178 = scmp.eq.s32.totalorder %s20, 2
    %p179 = por %p177, %p178
    %p181 = scmp.ne.s32.totalorder %s164, %s180
    %p182 = scmp.eq.s32.totalorder %s20, 0
    %p183 = por %p181, %p182
    %s184 = ssub.s32 %s14, %s21
    %p185 = scmp.eq.s32.totalorder %s184, 0
    %s187 = sadd.s32 %s186, 1
    %s188 = scalar_select %p185, %s186, %s187
    %p191 = pneg %p185
    %p192 = scmp.eq.s32.totalorder %s14, 2
    %p193 = por %p191, %p192
    %p194 = scmp.ne.s32.totalorder %s186, %s189
    %p195 = scmp.eq.s32.totalorder %s14, 0
    %p196 = por %p194, %p195
    %p197 = scmp.ne.s32.totalorder %s186, %s189
    %p198 = scmp.eq.s32.totalorder %s19, 2
    %p199 = por %p197, %p198
    %p200 = scmp.ne.s32.totalorder %s189, %s190
    %p201 = scmp.eq.s32.totalorder %s19, 0
    %p202 = por %p200, %p201
    %p203 = scmp.ne.s32.totalorder %s189, %s190
    %p204 = scmp.eq.s32.totalorder %s20, 2
    %p205 = por %p203, %p204
    %p207 = scmp.ne.s32.totalorder %s190, %s206
    %p208 = scmp.eq.s32.totalorder %s20, 0
    %p209 = por %p207, %p208
    %p210 = scmp.le.s32.totalorder 1, %s14
    %p211 = scmp.lt.s32.totalorder %s14, 4
    %p212 = pnand %p210, %p211
    %p213 = pneg %p212
    // Predicated region
    $region9: #{tpu_custom_call.1} parent=5 // pred_check
      _
    $region10: #{tpu_custom_call.1} parent=5 // pred_check_branch
      %215 = sbr.rel (%p212) target = $region12
    $region11: #{tpu_custom_call.1} parent=5 // pred_region
      %s216 = ssub.s32 %s14, 1
      // Predicated region
      $region13: #{tpu_custom_call.1} parent=11 // pred_check
        %p217 = pneg %p87
      $region14: #{tpu_custom_call.1} parent=11 // pred_check_branch
        %219 = sbr.rel (%p217) target = $region16
      $region15: #{tpu_custom_call.1} parent=11 // pred_region
        _
      $region16: #{tpu_custom_call.1} parent=11 // pred_fallthru
        _
      // Predicated region
      $region17: #{tpu_custom_call.1} parent=11 // pred_check
        %p220 = pneg %p108
      $region18: #{tpu_custom_call.1} parent=11 // pred_check_branch
        %222 = sbr.rel (%p220) target = $region20
      $region19: #{tpu_custom_call.1} parent=11 // pred_region
        _
      $region20: #{tpu_custom_call.1} parent=11 // pred_fallthru
        _
      // Predicated region
      $region21: #{tpu_custom_call.1} parent=11 // pred_check
        %p223 = pneg %p129
      $region22: #{tpu_custom_call.1} parent=11 // pred_check_branch
        %225 = sbr.rel (%p223) target = $region24
      $region23: #{tpu_custom_call.1} parent=11 // pred_region
        _
      $region24: #{tpu_custom_call.1} parent=11 // pred_fallthru
        _
      // Predicated region
      $region25: #{tpu_custom_call.1} parent=11 // pred_check
        %p226 = pneg %p150
      $region26: #{tpu_custom_call.1} parent=11 // pred_check_branch
        %228 = sbr.rel (%p226) target = $region28
      $region27: #{tpu_custom_call.1} parent=11 // pred_region
        _
      $region28: #{tpu_custom_call.1} parent=11 // pred_fallthru
        _
    $region12: #{tpu_custom_call.1} parent=5 // pred_fallthru
      _
    %p229 = scmp.lt.s32.totalorder %s14, 3
    // Predicated region
    $region29: #{tpu_custom_call.1} parent=5 // pred_check
      %p230 = pneg %p229
    $region30: #{tpu_custom_call.1} parent=5 // pred_check_branch
      %232 = sbr.rel (%p230) target = $region32
    $region31: #{tpu_custom_call.1} parent=5 // pred_region
      // Predicated region
      $region33: #{tpu_custom_call.1} parent=31 // pred_check
        %p233 = pneg %p34
      $region34: #{tpu_custom_call.1} parent=31 // pred_check_branch
        %235 = sbr.rel (%p233) target = $region36
      $region35: #{tpu_custom_call.1} parent=31 // pred_region
        %s236 = smul.u32 32, %s14
        %p237 = scmp.lt.s32.totalorder %s236, 95
        %s238 = scalar_select %p237, %s236, 95
        %s239 = smul.addr %s238, 4
        %s240 = scalar_lea.vmem %s0, %s239
        %s241 = smul.u32 32, %s14
      $region36: #{tpu_custom_call.1} parent=31 // pred_fallthru
        _
      // Predicated region
      $region37: #{tpu_custom_call.1} parent=31 // pred_check
        %p242 = pneg %p60
      $region38: #{tpu_custom_call.1} parent=31 // pred_check_branch
        %244 = sbr.rel (%p242) target = $region40
      $region39: #{tpu_custom_call.1} parent=31 // pred_region
        %s245 = smul.u32 32, %s14
        %p246 = scmp.lt.s32.totalorder %s245, 95
        %s247 = scalar_select %p246, %s245, 95
        %s248 = smul.addr %s247, 4
        %s249 = scalar_lea.vmem %s1, %s248
        %s250 = smul.u32 32, %s14
      $region40: #{tpu_custom_call.1} parent=31 // pred_fallthru
        _
    $region32: #{tpu_custom_call.1} parent=5 // pred_fallthru
      _
    %p251 = scmp.le.s32.totalorder 1, %s14
    %p252 = scmp.lt.s32.totalorder %s14, 4
    %p253 = pnand %p251, %p252
    %p254 = pneg %p253
    // Predicated region
    $region41: #{tpu_custom_call.1} parent=5 // pred_check
      _
    $region42: #{tpu_custom_call.1} parent=5 // pred_check_branch
      %256 = sbr.rel (%p253) target = $region44
    $region43: #{tpu_custom_call.1} parent=5 // pred_region
      %s257 = ssub.s32 %s14, 1
      %s258 = smul.u32 32, %s19
      %p259 = scmp.lt.s32.totalorder %s258, 95
      %s260 = scalar_select %p259, %s258, 95
      %s261 = smul.addr %s260, 4
      %s262 = scalar_lea.vmem %s0, %s261
      %p263 = pneg %p40
      %p264 = pneg %p37
      %s265 = smul.u32 32, %s19
      %p266 = scmp.lt.s32.totalorder %s265, 95
      %s267 = scalar_select %p266, %s265, 95
      %s268 = smul.addr %s267, 4
      %s269 = scalar_lea.vmem %s1, %s268
      %p270 = pneg %p66
      %p271 = pneg %p63
      %p272 = pneg %p87
      %p273 = pneg %p84
      %p274 = pneg %p108
      %p275 = pneg %p105
      %p276 = pneg %p129
      %p277 = pneg %p126
      %p278 = pneg %p150
      %p279 = pneg %p147
      %p280 = pneg %p176
      %p281 = pneg %p173
      %s282 = smul.u32 32, %s19
      %p283 = scmp.lt.s32.totalorder %s282, 95
      %s284 = scalar_select %p283, %s282, 95
      %s285 = smul.addr %s284, 4
      %s286 = scalar_lea.vmem %s6, %s285
      %p287 = pneg %p202
      %p288 = pneg %p199
      %s289 = smul.u32 32, %s19
      %p290 = scmp.lt.s32.totalorder %s289, 95
      %s291 = scalar_select %p290, %s289, 95
      %s292 = smul.addr %s291, 4
      %s293 = scalar_lea.vmem %s7, %s292
      %s294 = smul.u32 32, %s19
      %p295 = scmp.lt.s32.totalorder %s294, 95
      %s296 = scalar_select %p295, %s294, 95
      %s297 = smul.addr %s296, 4
      %s298 = scalar_lea.vmem %s0, %s297
      %s299 = smul.u32 32, %s19
      %s300 = smul.u32 32, %s19
      %p301 = scmp.lt.s32.totalorder %s300, 95
      %s302 = scalar_select %p301, %s300, 95
      %s303 = smul.addr %s302, 4
      %s304 = scalar_lea.vmem %s1, %s303
      %s305 = smul.u32 32, %s19
      %s306 = smul.u32 32, %s19
      %p307 = scmp.lt.s32.totalorder %s306, 95
      %s308 = scalar_select %p307, %s306, 95
      %s309 = smul.addr %s308, 4
      %s310 = scalar_lea.vmem %s6, %s309
      %s311 = smul.u32 32, %s19
      %s312 = smul.u32 32, %s19
      %p313 = scmp.lt.s32.totalorder %s312, 95
      %s314 = scalar_select %p313, %s312, 95
      %s315 = smul.addr %s314, 4
      %s316 = scalar_lea.vmem %s7, %s315
      %s317 = smul.u32 32, %s19
      %v319 = vld [vmem:[%s298] sm:$0xf]
      %v320 = vld [vmem:[%s298 + $0x4] sm:$0xf]
      %v321 = vld [vmem:[%s298 + $0x8] sm:$0xf]
      %v322 = vld [vmem:[%s298 + $0xc] sm:$0xf]
      %v323 = vld [vmem:[%s298 + $0x10] sm:$0xf]
      %v324 = vld [vmem:[%s298 + $0x14] sm:$0xf]
      %v325 = vld [vmem:[%s298 + $0x18] sm:$0xf]
      %v326 = vld [vmem:[%s298 + $0x1c] sm:$0xf]
      %v327 = vld [vmem:[%s298 + $0x20] sm:$0xf]
      %v328 = vld [vmem:[%s298 + $0x24] sm:$0xf]
      %v329 = vld [vmem:[%s298 + $0x28] sm:$0xf]
      %v330 = vld [vmem:[%s298 + $0x2c] sm:$0xf]
      %v331 = vld [vmem:[%s298 + $0x30] sm:$0xf]
      %v332 = vld [vmem:[%s298 + $0x34] sm:$0xf]
      %v333 = vld [vmem:[%s298 + $0x38] sm:$0xf]
      %v334 = vld [vmem:[%s298 + $0x3c] sm:$0xf]
      %v335 = vld [vmem:[%s298 + $0x40] sm:$0xf]
      %v336 = vld [vmem:[%s298 + $0x44] sm:$0xf]
      %v337 = vld [vmem:[%s298 + $0x48] sm:$0xf]
      %v338 = vld [vmem:[%s298 + $0x4c] sm:$0xf]
      %v339 = vld [vmem:[%s298 + $0x50] sm:$0xf]
      %v340 = vld [vmem:[%s298 + $0x54] sm:$0xf]
      %v341 = vld [vmem:[%s298 + $0x58] sm:$0xf]
      %v342 = vld [vmem:[%s298 + $0x5c] sm:$0xf]
      %v343 = vld [vmem:[%s298 + $0x60] sm:$0xf]
      %v344 = vld [vmem:[%s298 + $0x64] sm:$0xf]
      %v345 = vld [vmem:[%s298 + $0x68] sm:$0xf]
      %v346 = vld [vmem:[%s298 + $0x6c] sm:$0xf]
      %v347 = vld [vmem:[%s298 + $0x70] sm:$0xf]
      %v348 = vld [vmem:[%s298 + $0x74] sm:$0xf]
      %v349 = vld [vmem:[%s298 + $0x78] sm:$0xf]
      %v350 = vld [vmem:[%s298 + $0x7c] sm:$0xf]
      %v351 = vld [vmem:[%s304] sm:$0xf]
      %v352 = vld [vmem:[%s304 + $0x4] sm:$0xf]
      %v353 = vld [vmem:[%s304 + $0x8] sm:$0xf]
      %v354 = vld [vmem:[%s304 + $0xc] sm:$0xf]
      %v355 = vld [vmem:[%s304 + $0x10] sm:$0xf]
      %v356 = vld [vmem:[%s304 + $0x14] sm:$0xf]
      %v357 = vld [vmem:[%s304 + $0x18] sm:$0xf]
      %v358 = vld [vmem:[%s304 + $0x1c] sm:$0xf]
      %v359 = vld [vmem:[%s304 + $0x20] sm:$0xf]
      %v360 = vld [vmem:[%s304 + $0x24] sm:$0xf]
      %v361 = vld [vmem:[%s304 + $0x28] sm:$0xf]
      %v362 = vld [vmem:[%s304 + $0x2c] sm:$0xf]
      %v363 = vld [vmem:[%s304 + $0x30] sm:$0xf]
      %v364 = vld [vmem:[%s304 + $0x34] sm:$0xf]
      %v365 = vld [vmem:[%s304 + $0x38] sm:$0xf]
      %v366 = vld [vmem:[%s304 + $0x3c] sm:$0xf]
      %v367 = vld [vmem:[%s304 + $0x40] sm:$0xf]
      %v368 = vld [vmem:[%s304 + $0x44] sm:$0xf]
      %v369 = vld [vmem:[%s304 + $0x48] sm:$0xf]
      %v370 = vld [vmem:[%s304 + $0x4c] sm:$0xf]
      %v371 = vld [vmem:[%s304 + $0x50] sm:$0xf]
      %v372 = vld [vmem:[%s304 + $0x54] sm:$0xf]
      %v373 = vld [vmem:[%s304 + $0x58] sm:$0xf]
      %v374 = vld [vmem:[%s304 + $0x5c] sm:$0xf]
      %v375 = vld [vmem:[%s304 + $0x60] sm:$0xf]
      %v376 = vld [vmem:[%s304 + $0x64] sm:$0xf]
      %v377 = vld [vmem:[%s304 + $0x68] sm:$0xf]
      %v378 = vld [vmem:[%s304 + $0x6c] sm:$0xf]
      %v379 = vld [vmem:[%s304 + $0x70] sm:$0xf]
      %v380 = vld [vmem:[%s304 + $0x74] sm:$0xf]
      %v381 = vld [vmem:[%s304 + $0x78] sm:$0xf]
      %v382 = vld [vmem:[%s304 + $0x7c] sm:$0xf]
      %v383 = vld [vmem:[%s2] sm:$0xf]
      %v384 = vld [vmem:[%s2 + $0x4] sm:$0xf]
      %v385 = vld [vmem:[%s2 + $0x8] sm:$0xf]
      %v386 = vld [vmem:[%s2 + $0xc] sm:$0xf]
      %v387 = vld [vmem:[%s3] sm:$0xf]
      %v388 = vld [vmem:[%s3 + $0x4] sm:$0xf]
      %v389 = vld [vmem:[%s3 + $0x8] sm:$0xf]
      %v390 = vld [vmem:[%s3 + $0xc] sm:$0xf]
      %v391 = vld [vmem:[%s3 + $0x10] sm:$0xf]
      %v392 = vld [vmem:[%s3 + $0x14] sm:$0xf]
      %v393 = vld [vmem:[%s3 + $0x18] sm:$0xf]
      %v394 = vld [vmem:[%s3 + $0x1c] sm:$0xf]
      %v427 = vunpack.c.l.b16 %v351
      %v428 = vunpack.c.l.b16 %v352
      %v429 = vunpack.c.l.b16 %v353
      %v430 = vunpack.c.l.b16 %v354
      %v431 = vunpack.c.l.b16 %v355
      %v432 = vunpack.c.l.b16 %v356
      %v433 = vunpack.c.l.b16 %v357
      %v434 = vunpack.c.l.b16 %v358
      %v435 = vunpack.c.l.b16 %v359
      %v436 = vunpack.c.l.b16 %v360
      %v437 = vunpack.c.l.b16 %v361
      %v438 = vunpack.c.l.b16 %v362
      %v439 = vunpack.c.l.b16 %v363
      %v440 = vunpack.c.l.b16 %v364
      %v441 = vunpack.c.l.b16 %v365
      %v442 = vunpack.c.l.b16 %v366
      %v443 = vunpack.c.l.b16 %v367
      %v444 = vunpack.c.l.b16 %v368
      %v445 = vunpack.c.l.b16 %v369
      %v446 = vunpack.c.l.b16 %v370
      %v447 = vunpack.c.l.b16 %v371
      %v448 = vunpack.c.l.b16 %v372
      %v449 = vunpack.c.l.b16 %v373
      %v450 = vunpack.c.l.b16 %v374
      %v451 = vunpack.c.l.b16 %v375
      %v452 = vunpack.c.l.b16 %v376
      %v453 = vunpack.c.l.b16 %v377
      %v454 = vunpack.c.l.b16 %v378
      %v455 = vunpack.c.l.b16 %v379
      %v456 = vunpack.c.l.b16 %v380
      %v457 = vunpack.c.l.b16 %v381
      %v458 = vunpack.c.l.b16 %v382
      %v459 = vpack.c.b16 %v428, %v427
      %v460 = vpack.c.b16 %v430, %v429
      %v461 = vpack.c.b16 %v432, %v431
      %v462 = vpack.c.b16 %v434, %v433
      %v463 = vpack.c.b16 %v436, %v435
      %v464 = vpack.c.b16 %v438, %v437
      %v465 = vpack.c.b16 %v440, %v439
      %v466 = vpack.c.b16 %v442, %v441
      %v467 = vpack.c.b16 %v444, %v443
      %v468 = vpack.c.b16 %v446, %v445
      %v469 = vpack.c.b16 %v448, %v447
      %v470 = vpack.c.b16 %v450, %v449
      %v471 = vpack.c.b16 %v452, %v451
      %v472 = vpack.c.b16 %v454, %v453
      %v473 = vpack.c.b16 %v456, %v455
      %v474 = vpack.c.b16 %v458, %v457
      %v483 = vunpack.c.l.b16 %v387
      %v484 = vunpack.c.l.b16 %v388
      %v485 = vunpack.c.l.b16 %v389
      %v486 = vunpack.c.l.b16 %v390
      %v487 = vunpack.c.l.b16 %v391
      %v488 = vunpack.c.l.b16 %v392
      %v489 = vunpack.c.l.b16 %v393
      %v490 = vunpack.c.l.b16 %v394
      %v491 = vpack.c.b16 %v484, %v483
      %v492 = vpack.c.b16 %v486, %v485
      %v493 = vpack.c.b16 %v488, %v487
      %v494 = vpack.c.b16 %v490, %v489
      %vm499 = vcmask 523264
      %v501 = vsel %vm499, %v459, 0
      %v504 = vsel %vm499, %v460, 0
      %v507 = vsel %vm499, %v461, 0
      %v510 = vsel %vm499, %v462, 0
      %v513 = vsel %vm499, %v463, 0
      %v516 = vsel %vm499, %v464, 0
      %v519 = vsel %vm499, %v465, 0
      %v522 = vsel %vm499, %v466, 0
      %v525 = vsel %vm499, %v467, 0
      %v528 = vsel %vm499, %v468, 0
      %v531 = vsel %vm499, %v469, 0
      %v534 = vsel %vm499, %v470, 0
      %v537 = vsel %vm499, %v471, 0
      %v540 = vsel %vm499, %v472, 0
      %v543 = vsel %vm499, %v473, 0
      %v546 = vsel %vm499, %v474, 0
      %548 = vmatpush.bf16.msra.mxu0 0
      %549 = vmatpush.bf16.msra.mxu0 0
      %550 = vmatpush.bf16.msra.mxu0 0
      %551 = vmatpush.bf16.msra.mxu0 0
      %552 = vmatpush.bf16.msra.mxu0 %v494
      %553 = vmatpush.bf16.msra.mxu0 %v493
      %554 = vmatpush.bf16.msra.mxu0 %v492
      %555 = vmatpush.bf16.msra.mxu0 %v491
      %556 = vmatmul.bf16.gmra.mxu0 %v501
      %v557 = vpop.f32.mrf.mxu0
      %v558 = vadd.f32 0.0, %v557
      %v559 = vpop.f32.mrf.mxu0
      %v560 = vadd.f32 0.0, %v559
      %561 = vmatmul.bf16.gmra.mxu0 %v504
      %v562 = vpop.f32.mrf.mxu0
      %v563 = vadd.f32 0.0, %v562
      %v564 = vpop.f32.mrf.mxu0
      %v565 = vadd.f32 0.0, %v564
      %566 = vmatmul.bf16.gmra.mxu0 %v507
      %v567 = vpop.f32.mrf.mxu0
      %v568 = vadd.f32 0.0, %v567
      %v569 = vpop.f32.mrf.mxu0
      %v570 = vadd.f32 0.0, %v569
      %571 = vmatmul.bf16.gmra.mxu0 %v510
      %v572 = vpop.f32.mrf.mxu0
      %v573 = vadd.f32 0.0, %v572
      %v574 = vpop.f32.mrf.mxu0
      %v575 = vadd.f32 0.0, %v574
      %576 = vmatmul.bf16.gmra.mxu0 %v513
      %v577 = vpop.f32.mrf.mxu0
      %v578 = vadd.f32 0.0, %v577
      %v579 = vpop.f32.mrf.mxu0
      %v580 = vadd.f32 0.0, %v579
      %581 = vmatmul.bf16.gmra.mxu0 %v516
      %v582 = vpop.f32.mrf.mxu0
      %v583 = vadd.f32 0.0, %v582
      %v584 = vpop.f32.mrf.mxu0
      %v585 = vadd.f32 0.0, %v584
      %586 = vmatmul.bf16.gmra.mxu0 %v519
      %v587 = vpop.f32.mrf.mxu0
      %v588 = vadd.f32 0.0, %v587
      %v589 = vpop.f32.mrf.mxu0
      %v590 = vadd.f32 0.0, %v589
      %591 = vmatmul.bf16.gmra.mxu0 %v522
      %v592 = vpop.f32.mrf.mxu0
      %v593 = vadd.f32 0.0, %v592
      %v594 = vpop.f32.mrf.mxu0
      %v595 = vadd.f32 0.0, %v594
      %596 = vmatmul.bf16.gmra.mxu0 %v525
      %v597 = vpop.f32.mrf.mxu0
      %v598 = vadd.f32 0.0, %v597
      %v599 = vpop.f32.mrf.mxu0
      %v600 = vadd.f32 0.0, %v599
      %601 = vmatmul.bf16.gmra.mxu0 %v528
      %v602 = vpop.f32.mrf.mxu0
      %v603 = vadd.f32 0.0, %v602
      %v604 = vpop.f32.mrf.mxu0
      %v605 = vadd.f32 0.0, %v604
      %606 = vmatmul.bf16.gmra.mxu0 %v531
      %v607 = vpop.f32.mrf.mxu0
      %v608 = vadd.f32 0.0, %v607
      %v609 = vpop.f32.mrf.mxu0
      %v610 = vadd.f32 0.0, %v609
      %611 = vmatmul.bf16.gmra.mxu0 %v534
      %v612 = vpop.f32.mrf.mxu0
      %v613 = vadd.f32 0.0, %v612
      %v614 = vpop.f32.mrf.mxu0
      %v615 = vadd.f32 0.0, %v614
      %616 = vmatmul.bf16.gmra.mxu0 %v537
      %v617 = vpop.f32.mrf.mxu0
      %v618 = vadd.f32 0.0, %v617
      %v619 = vpop.f32.mrf.mxu0
      %v620 = vadd.f32 0.0, %v619
      %621 = vmatmul.bf16.gmra.mxu0 %v540
      %v622 = vpop.f32.mrf.mxu0
      %v623 = vadd.f32 0.0, %v622
      %v624 = vpop.f32.mrf.mxu0
      %v625 = vadd.f32 0.0, %v624
      %626 = vmatmul.bf16.gmra.mxu0 %v543
      %v627 = vpop.f32.mrf.mxu0
      %v628 = vadd.f32 0.0, %v627
      %v629 = vpop.f32.mrf.mxu0
      %v630 = vadd.f32 0.0, %v629
      %631 = vmatmul.bf16.gmra.mxu0 %v546
      %v632 = vpop.f32.mrf.mxu0
      %v633 = vadd.f32 0.0, %v632
      %v634 = vpop.f32.mrf.mxu0
      %v635 = vadd.f32 0.0, %v634
      %636 = vdwg.mxu0
      %v669 = vunpack.c.l.b16 %v319
      %v670 = vunpack.c.l.b16 %v320
      %v671 = vunpack.c.l.b16 %v321
      %v672 = vunpack.c.l.b16 %v322
      %v673 = vunpack.c.l.b16 %v323
      %v674 = vunpack.c.l.b16 %v324
      %v675 = vunpack.c.l.b16 %v325
      %v676 = vunpack.c.l.b16 %v326
      %v677 = vunpack.c.l.b16 %v327
      %v678 = vunpack.c.l.b16 %v328
      %v679 = vunpack.c.l.b16 %v329
      %v680 = vunpack.c.l.b16 %v330
      %v681 = vunpack.c.l.b16 %v331
      %v682 = vunpack.c.l.b16 %v332
      %v683 = vunpack.c.l.b16 %v333
      %v684 = vunpack.c.l.b16 %v334
      %v685 = vunpack.c.l.b16 %v335
      %v686 = vunpack.c.l.b16 %v336
      %v687 = vunpack.c.l.b16 %v337
      %v688 = vunpack.c.l.b16 %v338
      %v689 = vunpack.c.l.b16 %v339
      %v690 = vunpack.c.l.b16 %v340
      %v691 = vunpack.c.l.b16 %v341
      %v692 = vunpack.c.l.b16 %v342
      %v693 = vunpack.c.l.b16 %v343
      %v694 = vunpack.c.l.b16 %v344
      %v695 = vunpack.c.l.b16 %v345
      %v696 = vunpack.c.l.b16 %v346
      %v697 = vunpack.c.l.b16 %v347
      %v698 = vunpack.c.l.b16 %v348
      %v699 = vunpack.c.l.b16 %v349
      %v700 = vunpack.c.l.b16 %v350
      %v701 = vpack.c.b16 %v670, %v669
      %v702 = vpack.c.b16 %v672, %v671
      %v703 = vpack.c.b16 %v674, %v673
      %v704 = vpack.c.b16 %v676, %v675
      %v705 = vpack.c.b16 %v678, %v677
      %v706 = vpack.c.b16 %v680, %v679
      %v707 = vpack.c.b16 %v682, %v681
      %v708 = vpack.c.b16 %v684, %v683
      %v709 = vpack.c.b16 %v686, %v685
      %v710 = vpack.c.b16 %v688, %v687
      %v711 = vpack.c.b16 %v690, %v689
      %v712 = vpack.c.b16 %v692, %v691
      %v713 = vpack.c.b16 %v694, %v693
      %v714 = vpack.c.b16 %v696, %v695
      %v715 = vpack.c.b16 %v698, %v697
      %v716 = vpack.c.b16 %v700, %v699
      %v721 = vunpack.c.l.b16 %v383
      %v722 = vunpack.c.l.b16 %v384
      %v723 = vunpack.c.l.b16 %v385
      %v724 = vunpack.c.l.b16 %v386
      %v725 = vpack.c.b16 %v722, %v721
      %v726 = vpack.c.b16 %v724, %v723
      %vm729 = vcmask 261120
      %v731 = vsel %vm729, %v701, 0
      %v734 = vsel %vm729, %v702, 0
      %v737 = vsel %vm729, %v703, 0
      %v740 = vsel %vm729, %v704, 0
      %v743 = vsel %vm729, %v705, 0
      %v746 = vsel %vm729, %v706, 0
      %v749 = vsel %vm729, %v707, 0
      %v752 = vsel %vm729, %v708, 0
      %v755 = vsel %vm729, %v709, 0
      %v758 = vsel %vm729, %v710, 0
      %v761 = vsel %vm729, %v711, 0
      %v764 = vsel %vm729, %v712, 0
      %v767 = vsel %vm729, %v713, 0
      %v770 = vsel %vm729, %v714, 0
      %v773 = vsel %vm729, %v715, 0
      %v776 = vsel %vm729, %v716, 0
      %778 = vmatpush.bf16.msra.mxu0 0
      %779 = vmatpush.bf16.msra.mxu0 0
      %780 = vmatpush.bf16.msra.mxu0 0
      %781 = vmatpush.bf16.msra.mxu0 0
      %782 = vmatpush.bf16.msra.mxu0 0
      %783 = vmatpush.bf16.msra.mxu0 0
      %784 = vmatpush.bf16.msra.mxu0 %v726
      %785 = vmatpush.bf16.msra.mxu0 %v725
      %786 = vmatmul.bf16.gmra.mxu0 %v731
      %v787 = vpop.f32.mrf.mxu0
      %v788 = vadd.f32 %v558, %v787
      %v789 = vpop.f32.mrf.mxu0
      %v790 = vadd.f32 %v560, %v789
      %791 = vmatmul.bf16.gmra.mxu0 %v734
      %v792 = vpop.f32.mrf.mxu0
      %v793 = vadd.f32 %v563, %v792
      %v794 = vpop.f32.mrf.mxu0
      %v795 = vadd.f32 %v565, %v794
      %796 = vmatmul.bf16.gmra.mxu0 %v737
      %v797 = vpop.f32.mrf.mxu0
      %v798 = vadd.f32 %v568, %v797
      %v799 = vpop.f32.mrf.mxu0
      %v800 = vadd.f32 %v570, %v799
      %801 = vmatmul.bf16.gmra.mxu0 %v740
      %v802 = vpop.f32.mrf.mxu0
      %v803 = vadd.f32 %v573, %v802
      %v804 = vpop.f32.mrf.mxu0
      %v805 = vadd.f32 %v575, %v804
      %806 = vmatmul.bf16.gmra.mxu0 %v743
      %v807 = vpop.f32.mrf.mxu0
      %v808 = vadd.f32 %v578, %v807
      %v809 = vpop.f32.mrf.mxu0
      %v810 = vadd.f32 %v580, %v809
      %811 = vmatmul.bf16.gmra.mxu0 %v746
      %v812 = vpop.f32.mrf.mxu0
      %v813 = vadd.f32 %v583, %v812
      %v814 = vpop.f32.mrf.mxu0
      %v815 = vadd.f32 %v585, %v814
      %816 = vmatmul.bf16.gmra.mxu0 %v749
      %v817 = vpop.f32.mrf.mxu0
      %v818 = vadd.f32 %v588, %v817
      %v819 = vpop.f32.mrf.mxu0
      %v820 = vadd.f32 %v590, %v819
      %821 = vmatmul.bf16.gmra.mxu0 %v752
      %v822 = vpop.f32.mrf.mxu0
      %v823 = vadd.f32 %v593, %v822
      %v824 = vpop.f32.mrf.mxu0
      %v825 = vadd.f32 %v595, %v824
      %826 = vmatmul.bf16.gmra.mxu0 %v755
      %v827 = vpop.f32.mrf.mxu0
      %v828 = vadd.f32 %v598, %v827
      %v829 = vpop.f32.mrf.mxu0
      %v830 = vadd.f32 %v600, %v829
      %831 = vmatmul.bf16.gmra.mxu0 %v758
      %v832 = vpop.f32.mrf.mxu0
      %v833 = vadd.f32 %v603, %v832
      %v834 = vpop.f32.mrf.mxu0
      %v835 = vadd.f32 %v605, %v834
      %836 = vmatmul.bf16.gmra.mxu0 %v761
      %v837 = vpop.f32.mrf.mxu0
      %v838 = vadd.f32 %v608, %v837
      %v839 = vpop.f32.mrf.mxu0
      %v840 = vadd.f32 %v610, %v839
      %841 = vmatmul.bf16.gmra.mxu0 %v764
      %v842 = vpop.f32.mrf.mxu0
      %v843 = vadd.f32 %v613, %v842
      %v844 = vpop.f32.mrf.mxu0
      %v845 = vadd.f32 %v615, %v844
      %846 = vmatmul.bf16.gmra.mxu0 %v767
      %v847 = vpop.f32.mrf.mxu0
      %v848 = vadd.f32 %v618, %v847
      %v849 = vpop.f32.mrf.mxu0
      %v850 = vadd.f32 %v620, %v849
      %851 = vmatmul.bf16.gmra.mxu0 %v770
      %v852 = vpop.f32.mrf.mxu0
      %v853 = vadd.f32 %v623, %v852
      %v854 = vpop.f32.mrf.mxu0
      %v855 = vadd.f32 %v625, %v854
      %856 = vmatmul.bf16.gmra.mxu0 %v773
      %v857 = vpop.f32.mrf.mxu0
      %v858 = vadd.f32 %v628, %v857
      %v859 = vpop.f32.mrf.mxu0
      %v860 = vadd.f32 %v630, %v859
      %861 = vmatmul.bf16.gmra.mxu0 %v776
      %v862 = vpop.f32.mrf.mxu0
      %v863 = vadd.f32 %v633, %v862
      %v864 = vpop.f32.mrf.mxu0
      %v865 = vadd.f32 %v635, %v864
      %866 = vdwg.mxu0
      %v867 = vld [vmem:[%s4] sm:$0xf]
      %v868 = vld [vmem:[%s4 + $0x4] sm:$0xf]
      %v869 = vld [vmem:[%s4 + $0x8] sm:$0xf]
      %v870 = vld [vmem:[%s4 + $0xc] sm:$0xf]
      %v871 = vld [vmem:[%s5] sm:$0xf]
      %v872 = vld [vmem:[%s5 + $0x4] sm:$0xf]
      %v873 = vld [vmem:[%s5 + $0x8] sm:$0xf]
      %v874 = vld [vmem:[%s5 + $0xc] sm:$0xf]
      %v875 = vld [vmem:[%s5 + $0x10] sm:$0xf]
      %v876 = vld [vmem:[%s5 + $0x14] sm:$0xf]
      %v877 = vld [vmem:[%s5 + $0x18] sm:$0xf]
      %v878 = vld [vmem:[%s5 + $0x1c] sm:$0xf]
      %v887 = vunpack.c.l.b16 %v871
      %v888 = vunpack.c.l.b16 %v872
      %v889 = vunpack.c.l.b16 %v873
      %v890 = vunpack.c.l.b16 %v874
      %v891 = vunpack.c.l.b16 %v875
      %v892 = vunpack.c.l.b16 %v876
      %v893 = vunpack.c.l.b16 %v877
      %v894 = vunpack.c.l.b16 %v878
      %v895 = vpack.c.b16 %v888, %v887
      %v896 = vpack.c.b16 %v890, %v889
      %v897 = vpack.c.b16 %v892, %v891
      %v898 = vpack.c.b16 %v894, %v893
      %903 = vmatpush.bf16.msra.mxu0 0
      %904 = vmatpush.bf16.msra.mxu0 0
      %905 = vmatpush.bf16.msra.mxu0 0
      %906 = vmatpush.bf16.msra.mxu0 0
      %907 = vmatpush.bf16.msra.mxu0 %v898
      %908 = vmatpush.bf16.msra.mxu0 %v897
      %909 = vmatpush.bf16.msra.mxu0 %v896
      %910 = vmatpush.bf16.msra.mxu0 %v895
      %911 = vmatmul.bf16.gmra.mxu0 %v501
      %v912 = vpop.f32.mrf.mxu0
      %v913 = vadd.f32 0.0, %v912
      %v914 = vpop.f32.mrf.mxu0
      %v915 = vadd.f32 0.0, %v914
      %916 = vmatmul.bf16.gmra.mxu0 %v504
      %v917 = vpop.f32.mrf.mxu0
      %v918 = vadd.f32 0.0, %v917
      %v919 = vpop.f32.mrf.mxu0
      %v920 = vadd.f32 0.0, %v919
      %921 = vmatmul.bf16.gmra.mxu0 %v507
      %v922 = vpop.f32.mrf.mxu0
      %v923 = vadd.f32 0.0, %v922
      %v924 = vpop.f32.mrf.mxu0
      %v925 = vadd.f32 0.0, %v924
      %926 = vmatmul.bf16.gmra.mxu0 %v510
      %v927 = vpop.f32.mrf.mxu0
      %v928 = vadd.f32 0.0, %v927
      %v929 = vpop.f32.mrf.mxu0
      %v930 = vadd.f32 0.0, %v929
      %931 = vmatmul.bf16.gmra.mxu0 %v513
      %v932 = vpop.f32.mrf.mxu0
      %v933 = vadd.f32 0.0, %v932
      %v934 = vpop.f32.mrf.mxu0
      %v935 = vadd.f32 0.0, %v934
      %936 = vmatmul.bf16.gmra.mxu0 %v516
      %v937 = vpop.f32.mrf.mxu0
      %v938 = vadd.f32 0.0, %v937
      %v939 = vpop.f32.mrf.mxu0
      %v940 = vadd.f32 0.0, %v939
      %941 = vmatmul.bf16.gmra.mxu0 %v519
      %v942 = vpop.f32.mrf.mxu0
      %v943 = vadd.f32 0.0, %v942
      %v944 = vpop.f32.mrf.mxu0
      %v945 = vadd.f32 0.0, %v944
      %946 = vmatmul.bf16.gmra.mxu0 %v522
      %v947 = vpop.f32.mrf.mxu0
      %v948 = vadd.f32 0.0, %v947
      %v949 = vpop.f32.mrf.mxu0
      %v950 = vadd.f32 0.0, %v949
      %951 = vmatmul.bf16.gmra.mxu0 %v525
      %v952 = vpop.f32.mrf.mxu0
      %v953 = vadd.f32 0.0, %v952
      %v954 = vpop.f32.mrf.mxu0
      %v955 = vadd.f32 0.0, %v954
      %956 = vmatmul.bf16.gmra.mxu0 %v528
      %v957 = vpop.f32.mrf.mxu0
      %v958 = vadd.f32 0.0, %v957
      %v959 = vpop.f32.mrf.mxu0
      %v960 = vadd.f32 0.0, %v959
      %961 = vmatmul.bf16.gmra.mxu0 %v531
      %v962 = vpop.f32.mrf.mxu0
      %v963 = vadd.f32 0.0, %v962
      %v964 = vpop.f32.mrf.mxu0
      %v965 = vadd.f32 0.0, %v964
      %966 = vmatmul.bf16.gmra.mxu0 %v534
      %v967 = vpop.f32.mrf.mxu0
      %v968 = vadd.f32 0.0, %v967
      %v969 = vpop.f32.mrf.mxu0
      %v970 = vadd.f32 0.0, %v969
      %971 = vmatmul.bf16.gmra.mxu0 %v537
      %v972 = vpop.f32.mrf.mxu0
      %v973 = vadd.f32 0.0, %v972
      %v974 = vpop.f32.mrf.mxu0
      %v975 = vadd.f32 0.0, %v974
      %976 = vmatmul.bf16.gmra.mxu0 %v540
      %v977 = vpop.f32.mrf.mxu0
      %v978 = vadd.f32 0.0, %v977
      %v979 = vpop.f32.mrf.mxu0
      %v980 = vadd.f32 0.0, %v979
      %981 = vmatmul.bf16.gmra.mxu0 %v543
      %v982 = vpop.f32.mrf.mxu0
      %v983 = vadd.f32 0.0, %v982
      %v984 = vpop.f32.mrf.mxu0
      %v985 = vadd.f32 0.0, %v984
      %986 = vmatmul.bf16.gmra.mxu0 %v546
      %v987 = vpop.f32.mrf.mxu0
      %v988 = vadd.f32 0.0, %v987
      %v989 = vpop.f32.mrf.mxu0
      %v990 = vadd.f32 0.0, %v989
      %991 = vdwg.mxu0
      %v996 = vunpack.c.l.b16 %v867
      %v997 = vunpack.c.l.b16 %v868
      %v998 = vunpack.c.l.b16 %v869
      %v999 = vunpack.c.l.b16 %v870
      %v1000 = vpack.c.b16 %v997, %v996
      %v1001 = vpack.c.b16 %v999, %v998
      %1004 = vmatpush.bf16.msra.mxu0 0
      %1005 = vmatpush.bf16.msra.mxu0 0
      %1006 = vmatpush.bf16.msra.mxu0 0
      %1007 = vmatpush.bf16.msra.mxu0 0
      %1008 = vmatpush.bf16.msra.mxu0 0
      %1009 = vmatpush.bf16.msra.mxu0 0
      %1010 = vmatpush.bf16.msra.mxu0 %v1001
      %1011 = vmatpush.bf16.msra.mxu0 %v1000
      %1012 = vmatmul.bf16.gmra.mxu0 %v731
      %v1013 = vpop.f32.mrf.mxu0
      %v1014 = vadd.f32 %v913, %v1013
      %v1015 = vpop.f32.mrf.mxu0
      %v1016 = vadd.f32 %v915, %v1015
      %1017 = vmatmul.bf16.gmra.mxu0 %v734
      %v1018 = vpop.f32.mrf.mxu0
      %v1019 = vadd.f32 %v918, %v1018
      %v1020 = vpop.f32.mrf.mxu0
      %v1021 = vadd.f32 %v920, %v1020
      %1022 = vmatmul.bf16.gmra.mxu0 %v737
      %v1023 = vpop.f32.mrf.mxu0
      %v1024 = vadd.f32 %v923, %v1023
      %v1025 = vpop.f32.mrf.mxu0
      %v1026 = vadd.f32 %v925, %v1025
      %1027 = vmatmul.bf16.gmra.mxu0 %v740
      %v1028 = vpop.f32.mrf.mxu0
      %v1029 = vadd.f32 %v928, %v1028
      %v1030 = vpop.f32.mrf.mxu0
      %v1031 = vadd.f32 %v930, %v1030
      %1032 = vmatmul.bf16.gmra.mxu0 %v743
      %v1033 = vpop.f32.mrf.mxu0
      %v1034 = vadd.f32 %v933, %v1033
      %v1035 = vpop.f32.mrf.mxu0
      %v1036 = vadd.f32 %v935, %v1035
      %1037 = vmatmul.bf16.gmra.mxu0 %v746
      %v1038 = vpop.f32.mrf.mxu0
      %v1039 = vadd.f32 %v938, %v1038
      %v1040 = vpop.f32.mrf.mxu0
      %v1041 = vadd.f32 %v940, %v1040
      %1042 = vmatmul.bf16.gmra.mxu0 %v749
      %v1043 = vpop.f32.mrf.mxu0
      %v1044 = vadd.f32 %v943, %v1043
      %v1045 = vpop.f32.mrf.mxu0
      %v1046 = vadd.f32 %v945, %v1045
      %1047 = vmatmul.bf16.gmra.mxu0 %v752
      %v1048 = vpop.f32.mrf.mxu0
      %v1049 = vadd.f32 %v948, %v1048
      %v1050 = vpop.f32.mrf.mxu0
      %v1051 = vadd.f32 %v950, %v1050
      %1052 = vmatmul.bf16.gmra.mxu0 %v755
      %v1053 = vpop.f32.mrf.mxu0
      %v1054 = vadd.f32 %v953, %v1053
      %v1055 = vpop.f32.mrf.mxu0
      %v1056 = vadd.f32 %v955, %v1055
      %1057 = vmatmul.bf16.gmra.mxu0 %v758
      %v1058 = vpop.f32.mrf.mxu0
      %v1059 = vadd.f32 %v958, %v1058
      %v1060 = vpop.f32.mrf.mxu0
      %v1061 = vadd.f32 %v960, %v1060
      %1062 = vmatmul.bf16.gmra.mxu0 %v761
      %v1063 = vpop.f32.mrf.mxu0
      %v1064 = vadd.f32 %v963, %v1063
      %v1065 = vpop.f32.mrf.mxu0
      %v1066 = vadd.f32 %v965, %v1065
      %1067 = vmatmul.bf16.gmra.mxu0 %v764
      %v1068 = vpop.f32.mrf.mxu0
      %v1069 = vadd.f32 %v968, %v1068
      %v1070 = vpop.f32.mrf.mxu0
      %v1071 = vadd.f32 %v970, %v1070
      %1072 = vmatmul.bf16.gmra.mxu0 %v767
      %v1073 = vpop.f32.mrf.mxu0
      %v1074 = vadd.f32 %v973, %v1073
      %v1075 = vpop.f32.mrf.mxu0
      %v1076 = vadd.f32 %v975, %v1075
      %1077 = vmatmul.bf16.gmra.mxu0 %v770
      %v1078 = vpop.f32.mrf.mxu0
      %v1079 = vadd.f32 %v978, %v1078
      %v1080 = vpop.f32.mrf.mxu0
      %v1081 = vadd.f32 %v980, %v1080
      %1082 = vmatmul.bf16.gmra.mxu0 %v773
      %v1083 = vpop.f32.mrf.mxu0
      %v1084 = vadd.f32 %v983, %v1083
      %v1085 = vpop.f32.mrf.mxu0
      %v1086 = vadd.f32 %v985, %v1085
      %1087 = vmatmul.bf16.gmra.mxu0 %v776
      %v1088 = vpop.f32.mrf.mxu0
      %v1089 = vadd.f32 %v988, %v1088
      %v1090 = vpop.f32.mrf.mxu0
      %v1091 = vadd.f32 %v990, %v1090
      %1092 = vdwg.mxu0
      %v1093 = vpack.c.bf16 %v788, %v788
      %v1094 = vpack.c.bf16 %v790, %v790
      %v1095 = vpack.c.bf16 %v793, %v793
      %v1096 = vpack.c.bf16 %v795, %v795
      %v1097 = vpack.c.bf16 %v798, %v798
      %v1098 = vpack.c.bf16 %v800, %v800
      %v1099 = vpack.c.bf16 %v803, %v803
      %v1100 = vpack.c.bf16 %v805, %v805
      %v1101 = vpack.c.bf16 %v808, %v808
      %v1102 = vpack.c.bf16 %v810, %v810
      %v1103 = vpack.c.bf16 %v813, %v813
      %v1104 = vpack.c.bf16 %v815, %v815
      %v1105 = vpack.c.bf16 %v818, %v818
      %v1106 = vpack.c.bf16 %v820, %v820
      %v1107 = vpack.c.bf16 %v823, %v823
      %v1108 = vpack.c.bf16 %v825, %v825
      %v1109 = vpack.c.bf16 %v828, %v828
      %v1110 = vpack.c.bf16 %v830, %v830
      %v1111 = vpack.c.bf16 %v833, %v833
      %v1112 = vpack.c.bf16 %v835, %v835
      %v1113 = vpack.c.bf16 %v838, %v838
      %v1114 = vpack.c.bf16 %v840, %v840
      %v1115 = vpack.c.bf16 %v843, %v843
      %v1116 = vpack.c.bf16 %v845, %v845
      %v1117 = vpack.c.bf16 %v848, %v848
      %v1118 = vpack.c.bf16 %v850, %v850
      %v1119 = vpack.c.bf16 %v853, %v853
      %v1120 = vpack.c.bf16 %v855, %v855
      %v1121 = vpack.c.bf16 %v858, %v858
      %v1122 = vpack.c.bf16 %v860, %v860
      %v1123 = vpack.c.bf16 %v863, %v863
      %v1124 = vpack.c.bf16 %v865, %v865
      %vm1125 = vcmask 257024
      %1126 = vst.msk [vmem:[%s310] sm:$0xf] %vm1125, %v1093
      %1127 = vst.msk [vmem:[%s310 + $0x4] sm:$0xf] %vm1125, %v1094
      %1128 = vst.msk [vmem:[%s310 + $0x8] sm:$0xf] %vm1125, %v1095
      %1129 = vst.msk [vmem:[%s310 + $0xc] sm:$0xf] %vm1125, %v1096
      %1130 = vst.msk [vmem:[%s310 + $0x10] sm:$0xf] %vm1125, %v1097
      %1131 = vst.msk [vmem:[%s310 + $0x14] sm:$0xf] %vm1125, %v1098
      %1132 = vst.msk [vmem:[%s310 + $0x18] sm:$0xf] %vm1125, %v1099
      %1133 = vst.msk [vmem:[%s310 + $0x1c] sm:$0xf] %vm1125, %v1100
      %1134 = vst.msk [vmem:[%s310 + $0x20] sm:$0xf] %vm1125, %v1101
      %1135 = vst.msk [vmem:[%s310 + $0x24] sm:$0xf] %vm1125, %v1102
      %1136 = vst.msk [vmem:[%s310 + $0x28] sm:$0xf] %vm1125, %v1103
      %1137 = vst.msk [vmem:[%s310 + $0x2c] sm:$0xf] %vm1125, %v1104
      %1138 = vst.msk [vmem:[%s310 + $0x30] sm:$0xf] %vm1125, %v1105
      %1139 = vst.msk [vmem:[%s310 + $0x34] sm:$0xf] %vm1125, %v1106
      %1140 = vst.msk [vmem:[%s310 + $0x38] sm:$0xf] %vm1125, %v1107
      %1141 = vst.msk [vmem:[%s310 + $0x3c] sm:$0xf] %vm1125, %v1108
      %1142 = vst.msk [vmem:[%s310 + $0x40] sm:$0xf] %vm1125, %v1109
      %1143 = vst.msk [vmem:[%s310 + $0x44] sm:$0xf] %vm1125, %v1110
      %1144 = vst.msk [vmem:[%s310 + $0x48] sm:$0xf] %vm1125, %v1111
      %1145 = vst.msk [vmem:[%s310 + $0x4c] sm:$0xf] %vm1125, %v1112
      %1146 = vst.msk [vmem:[%s310 + $0x50] sm:$0xf] %vm1125, %v1113
      %1147 = vst.msk [vmem:[%s310 + $0x54] sm:$0xf] %vm1125, %v1114
      %1148 = vst.msk [vmem:[%s310 + $0x58] sm:$0xf] %vm1125, %v1115
      %1149 = vst.msk [vmem:[%s310 + $0x5c] sm:$0xf] %vm1125, %v1116
      %1150 = vst.msk [vmem:[%s310 + $0x60] sm:$0xf] %vm1125, %v1117
      %1151 = vst.msk [vmem:[%s310 + $0x64] sm:$0xf] %vm1125, %v1118
      %1152 = vst.msk [vmem:[%s310 + $0x68] sm:$0xf] %vm1125, %v1119
      %1153 = vst.msk [vmem:[%s310 + $0x6c] sm:$0xf] %vm1125, %v1120
      %1154 = vst.msk [vmem:[%s310 + $0x70] sm:$0xf] %vm1125, %v1121
      %1155 = vst.msk [vmem:[%s310 + $0x74] sm:$0xf] %vm1125, %v1122
      %1156 = vst.msk [vmem:[%s310 + $0x78] sm:$0xf] %vm1125, %v1123
      %1157 = vst.msk [vmem:[%s310 + $0x7c] sm:$0xf] %vm1125, %v1124
      %v1158 = vpack.c.bf16 %v1014, %v1014
      %v1159 = vpack.c.bf16 %v1016, %v1016
      %v1160 = vpack.c.bf16 %v1019, %v1019
      %v1161 = vpack.c.bf16 %v1021, %v1021
      %v1162 = vpack.c.bf16 %v1024, %v1024
      %v1163 = vpack.c.bf16 %v1026, %v1026
      %v1164 = vpack.c.bf16 %v1029, %v1029
      %v1165 = vpack.c.bf16 %v1031, %v1031
      %v1166 = vpack.c.bf16 %v1034, %v1034
      %v1167 = vpack.c.bf16 %v1036, %v1036
      %v1168 = vpack.c.bf16 %v1039, %v1039
      %v1169 = vpack.c.bf16 %v1041, %v1041
      %v1170 = vpack.c.bf16 %v1044, %v1044
      %v1171 = vpack.c.bf16 %v1046, %v1046
      %v1172 = vpack.c.bf16 %v1049, %v1049
      %v1173 = vpack.c.bf16 %v1051, %v1051
      %v1174 = vpack.c.bf16 %v1054, %v1054
      %v1175 = vpack.c.bf16 %v1056, %v1056
      %v1176 = vpack.c.bf16 %v1059, %v1059
      %v1177 = vpack.c.bf16 %v1061, %v1061
      %v1178 = vpack.c.bf16 %v1064, %v1064
      %v1179 = vpack.c.bf16 %v1066, %v1066
      %v1180 = vpack.c.bf16 %v1069, %v1069
      %v1181 = vpack.c.bf16 %v1071, %v1071
      %v1182 = vpack.c.bf16 %v1074, %v1074
      %v1183 = vpack.c.bf16 %v1076, %v1076
      %v1184 = vpack.c.bf16 %v1079, %v1079
      %v1185 = vpack.c.bf16 %v1081, %v1081
      %v1186 = vpack.c.bf16 %v1084, %v1084
      %v1187 = vpack.c.bf16 %v1086, %v1086
      %v1188 = vpack.c.bf16 %v1089, %v1089
      %v1189 = vpack.c.bf16 %v1091, %v1091
      %1190 = vst.msk [vmem:[%s316] sm:$0xf] %vm1125, %v1158
      %1191 = vst.msk [vmem:[%s316 + $0x4] sm:$0xf] %vm1125, %v1159
      %1192 = vst.msk [vmem:[%s316 + $0x8] sm:$0xf] %vm1125, %v1160
      %1193 = vst.msk [vmem:[%s316 + $0xc] sm:$0xf] %vm1125, %v1161
      %1194 = vst.msk [vmem:[%s316 + $0x10] sm:$0xf] %vm1125, %v1162
      %1195 = vst.msk [vmem:[%s316 + $0x14] sm:$0xf] %vm1125, %v1163
      %1196 = vst.msk [vmem:[%s316 + $0x18] sm:$0xf] %vm1125, %v1164
      %1197 = vst.msk [vmem:[%s316 + $0x1c] sm:$0xf] %vm1125, %v1165
      %1198 = vst.msk [vmem:[%s316 + $0x20] sm:$0xf] %vm1125, %v1166
      %1199 = vst.msk [vmem:[%s316 + $0x24] sm:$0xf] %vm1125, %v1167
      %1200 = vst.msk [vmem:[%s316 + $0x28] sm:$0xf] %vm1125, %v1168
      %1201 = vst.msk [vmem:[%s316 + $0x2c] sm:$0xf] %vm1125, %v1169
      %1202 = vst.msk [vmem:[%s316 + $0x30] sm:$0xf] %vm1125, %v1170
      %1203 = vst.msk [vmem:[%s316 + $0x34] sm:$0xf] %vm1125, %v1171
      %1204 = vst.msk [vmem:[%s316 + $0x38] sm:$0xf] %vm1125, %v1172
      %1205 = vst.msk [vmem:[%s316 + $0x3c] sm:$0xf] %vm1125, %v1173
      %1206 = vst.msk [vmem:[%s316 + $0x40] sm:$0xf] %vm1125, %v1174
      %1207 = vst.msk [vmem:[%s316 + $0x44] sm:$0xf] %vm1125, %v1175
      %1208 = vst.msk [vmem:[%s316 + $0x48] sm:$0xf] %vm1125, %v1176
      %1209 = vst.msk [vmem:[%s316 + $0x4c] sm:$0xf] %vm1125, %v1177
      %1210 = vst.msk [vmem:[%s316 + $0x50] sm:$0xf] %vm1125, %v1178
      %1211 = vst.msk [vmem:[%s316 + $0x54] sm:$0xf] %vm1125, %v1179
      %1212 = vst.msk [vmem:[%s316 + $0x58] sm:$0xf] %vm1125, %v1180
      %1213 = vst.msk [vmem:[%s316 + $0x5c] sm:$0xf] %vm1125, %v1181
      %1214 = vst.msk [vmem:[%s316 + $0x60] sm:$0xf] %vm1125, %v1182
      %1215 = vst.msk [vmem:[%s316 + $0x64] sm:$0xf] %vm1125, %v1183
      %1216 = vst.msk [vmem:[%s316 + $0x68] sm:$0xf] %vm1125, %v1184
      %1217 = vst.msk [vmem:[%s316 + $0x6c] sm:$0xf] %vm1125, %v1185
      %1218 = vst.msk [vmem:[%s316 + $0x70] sm:$0xf] %vm1125, %v1186
      %1219 = vst.msk [vmem:[%s316 + $0x74] sm:$0xf] %vm1125, %v1187
      %1220 = vst.msk [vmem:[%s316 + $0x78] sm:$0xf] %vm1125, %v1188
      %1221 = vst.msk [vmem:[%s316 + $0x7c] sm:$0xf] %vm1125, %v1189
      %s1222 = smul.u32 32, %s19
      %p1223 = scmp.lt.s32.totalorder %s1222, 95
      %s1224 = scalar_select %p1223, %s1222, 95
      %s1225 = smul.addr %s1224, 4
      %s1226 = scalar_lea.vmem %s6, %s1225
      %s1227 = smul.u32 32, %s19
      %p1228 = scmp.lt.s32.totalorder %s1227, 95
      %s1229 = scalar_select %p1228, %s1227, 95
      %s1230 = smul.addr %s1229, 4
      %s1231 = scalar_lea.vmem %s7, %s1230
      // Predicated region
      $region45: #{tpu_custom_call.1} parent=43 // pred_check
        %p1232 = pneg %p173
      $region46: #{tpu_custom_call.1} parent=43 // pred_check_branch
        %1234 = sbr.rel (%p1232) target = $region48
      $region47: #{tpu_custom_call.1} parent=43 // pred_region
        %s1235 = smul.u32 32, %s19
      $region48: #{tpu_custom_call.1} parent=43 // pred_fallthru
        _
      // Predicated region
      $region49: #{tpu_custom_call.1} parent=43 // pred_check
        %p1236 = pneg %p199
      $region50: #{tpu_custom_call.1} parent=43 // pred_check_branch
        %1238 = sbr.rel (%p1236) target = $region52
      $region51: #{tpu_custom_call.1} parent=43 // pred_region
        %s1239 = smul.u32 32, %s19
      $region52: #{tpu_custom_call.1} parent=43 // pred_fallthru
        _
    $region44: #{tpu_custom_call.1} parent=5 // pred_fallthru
      _
    %p1240 = scmp.le.s32.totalorder 2, %s14
    // Predicated region
    $region53: #{tpu_custom_call.1} parent=5 // pred_check
      %p1241 = pneg %p1240
    $region54: #{tpu_custom_call.1} parent=5 // pred_check_branch
      %1243 = sbr.rel (%p1241) target = $region56
    $region55: #{tpu_custom_call.1} parent=5 // pred_region
      %s1244 = ssub.s32 %s14, 2
      // Predicated region
      $region57: #{tpu_custom_call.1} parent=55 // pred_check
        %p1245 = pneg %p179
      $region58: #{tpu_custom_call.1} parent=55 // pred_check_branch
        %1247 = sbr.rel (%p1245) target = $region60
      $region59: #{tpu_custom_call.1} parent=55 // pred_region
        %s1248 = smul.u32 32, %s20
        %p1249 = scmp.lt.s32.totalorder %s1248, 95
        %s1250 = scalar_select %p1249, %s1248, 95
        %s1251 = smul.addr %s1250, 4
        %s1252 = scalar_lea.vmem %s6, %s1251
      $region60: #{tpu_custom_call.1} parent=55 // pred_fallthru
        _
      // Predicated region
      $region61: #{tpu_custom_call.1} parent=55 // pred_check
        %p1253 = pneg %p205
      $region62: #{tpu_custom_call.1} parent=55 // pred_check_branch
        %1255 = sbr.rel (%p1253) target = $region64
      $region63: #{tpu_custom_call.1} parent=55 // pred_region
        %s1256 = smul.u32 32, %s20
        %p1257 = scmp.lt.s32.totalorder %s1256, 95
        %s1258 = scalar_select %p1257, %s1256, 95
        %s1259 = smul.addr %s1258, 4
        %s1260 = scalar_lea.vmem %s7, %s1259
      $region64: #{tpu_custom_call.1} parent=55 // pred_fallthru
        _
    $region56: #{tpu_custom_call.1} parent=5 // pred_fallthru
      _
  $region6: #{tpu_custom_call.1} parent=0 // loop_footer
    %s18 = sadd.s32 1, %s14
  $region7: #{tpu_custom_call.1} parent=0 // loop_footer_branch
    %13 = sbr.rel target = $region3
  $region8: #{tpu_custom_call.1} parent=0 // loop_exit
    _

</llo_original>
